<compile_context>
chip_gen: v7x
topology: tpu7x:2x2x1
jax: 0.10.0
libtpu: 0.0.40
codegen_flags: <defaults>
</compile_context>

<pallas_src>
import functools

import jax
import jax.numpy as jnp
from jax import lax
from jax.experimental import pallas as pl
from jax.experimental.pallas import tpu as pltpu

_LANES = 128
_SUBLANES = 8
_EPS = 1e-7                 # only used by the pure-JAX reference (PyTorch spec)
_BLOCK_ROWS_MAX = 2048      # (2048, 128) f32 = 1 MiB / operand / pipeline buffer
_NUM_SHARDS = 2             # leading "parallel" axis (2 TCs on v7x; no-op otherwise)


def _round_up(x, m):
    return ((x + m - 1) // m) * m


def _wbce_kernel(x_ref, y_ref, out_ref, *, w_p, w_n, n_total, block_rows, steps):
    c = pl.program_id(0)          # shard (parallel axis)
    i = pl.program_id(1)          # reduction step within the shard (arbitrary)

    # The (8,128) output block is resident across the whole `i` axis -> use it
    # directly as the vector accumulator.
    @pl.when(i == 0)
    def _():
        out_ref[...] = jnp.zeros_like(out_ref)

    x = x_ref[...].astype(jnp.float32)
    y = y_ref[...].astype(jnp.float32)

    # log(sigmoid(x)) = x - softplus(x);  log(1 - sigmoid(x)) = -softplus(x)
    sp = jnp.maximum(x, 0.0) + jnp.log1p(jnp.exp(-jnp.abs(x)))
    contrib = w_p * y * (x - sp) - w_n * (1.0 - y) * sp   # (block_rows, 128) f32

    def fold(v):
        # (block_rows,128) -> (block_rows//8, 8, 128), sum leading axis:
        # pure vreg adds, keeps the cross-lane reduce out of the hot loop.
        return v.reshape(-1, _SUBLANES, _LANES).sum(axis=0)

    blk = c * steps + i                        # unclamped global block index
    first_elem = blk * (block_rows * _LANES)   # assumes n_total < 2**31
    need_mask = first_elem + block_rows * _LANES > n_total

    @pl.when(jnp.logical_not(need_mask))
    def _():
        out_ref[...] += fold(contrib)

    @pl.when(need_mask)
    def _():
        # Only ragged-tail / clamped blocks pay for the iota mask.
        row = lax.broadcasted_iota(jnp.int32, contrib.shape, 0)
        lane = lax.broadcasted_iota(jnp.int32, contrib.shape, 1)
        gidx = first_elem + row * _LANES + lane
        out_ref[...] += fold(jnp.where(gidx < n_total, contrib, 0.0))


def weighted_bce(logits, labels, w_p, w_n):
    assert logits.shape == labels.shape
    n_total = logits.size

    flat_x = logits.reshape(-1)
    flat_y = labels.reshape(-1)

    # Lane-pad only when n_total is not a multiple of 128 (the plain reshape of
    # a contiguous array is otherwise free).
    padded = pl.cdiv(n_total, _LANES) * _LANES
    pad = padded - n_total
    if pad:
        # TODO(synk): for fully pad-free generality, run the divisible prefix in
        # the kernel and handle the <128-element remainder in plain JAX.
        flat_x = jnp.pad(flat_x, (0, pad))
        flat_y = jnp.pad(flat_y, (0, pad))

    rows = padded // _LANES
    x2d = flat_x.reshape(rows, _LANES)
    y2d = flat_y.reshape(rows, _LANES)

    num_shards = _NUM_SHARDS
    steps = max(1, pl.cdiv(rows, num_shards * _BLOCK_ROWS_MAX))
    block_rows = _round_up(pl.cdiv(rows, num_shards * steps), _SUBLANES)
    # Last block whose start row is in-bounds; any grid step beyond it is
    # clamped here (re-reads valid data) and fully masked out in-kernel.
    last_blk = pl.cdiv(rows, block_rows) - 1

    def idx_map(c, i):
        return (jnp.minimum(c * steps + i, last_blk), 0)

    blk_spec = pl.BlockSpec((block_rows, _LANES), idx_map)

    kernel = functools.partial(
        _wbce_kernel, w_p=float(w_p), w_n=float(w_n),
        n_total=n_total, block_rows=block_rows, steps=steps)

    partials = pl.pallas_call(
        kernel,
        out_shape=jax.ShapeDtypeStruct((num_shards * _SUBLANES, _LANES),
                                       jnp.float32),
        grid_spec=pltpu.PrefetchScalarGridSpec(
            num_scalar_prefetch=0,
            grid=(num_shards, steps),
            in_specs=[blk_spec, blk_spec],
            out_specs=pl.BlockSpec((_SUBLANES, _LANES), lambda c, i: (c, 0)),
        ),
        compiler_params=pltpu.CompilerParams(
            dimension_semantics=("parallel", "arbitrary")),
    )(x2d, y2d)

    # loss = -(1/N) * sum(pos + neg); tiny final cross-lane reduce done in XLA.
    return -jnp.sum(partials) / jnp.float32(n_total)


def weighted_bce_ref(logits, labels, w_p, w_n, eps=_EPS):
    ps = jax.nn.sigmoid(logits.astype(jnp.float32))
    labels = labels.astype(jnp.float32)
    loss_pos = -jnp.mean(w_p * labels * jnp.log(ps + eps))
    loss_neg = -jnp.mean(w_n * (1.0 - labels) * jnp.log(1.0 - ps + eps))
    return loss_pos + loss_neg


if __name__ == "__main__":
    key = jax.random.PRNGKey(0)
    k1, k2 = jax.random.split(key)

    # Deterministic "module parameters" (scalars in the PyTorch __init__).
    w_p, w_n = 2.0, 0.5

    B, C, H, W = 2, 4, 16, 16
    logits = jax.random.normal(k1, (B, C, H, W), jnp.float32)
    labels = (jax.random.uniform(k2, (B, C, H, W)) > 0.5).astype(jnp.float32)

    loss = jax.block_until_ready(weighted_bce(logits, labels, w_p, w_n))
    ref = weighted_bce_ref(logits, labels, w_p, w_n)
    assert jnp.allclose(loss, ref, rtol=1e-5, atol=1e-5), (loss, ref)
    print("KERNEL_OK")
</pallas_src>

<mosaic_0001>
module attributes {stable_mosaic.version = 11 : i64} {
  func.func @_wbce_kernel(%arg0: i32, %arg1: i32, %arg2: memref<8x128xf32, #tpu.memory_space<vmem>>, %arg3: memref<8x128xf32, #tpu.memory_space<vmem>>, %arg4: memref<8x128xf32, #tpu.memory_space<vmem>>) attributes {dimension_semantics = [#tpu.dimension_semantics<parallel>, #tpu.dimension_semantics<arbitrary>], iteration_bounds = array<i64: 2, 1>, scalar_prefetch = 0 : i64, scratch_operands = 0 : i64, tpu.core_type = #tpu.core_type<tc>, window_params = [{transform_indices = @transform_0, window_bounds = array<i64: 8, 128>}, {transform_indices = @transform_1, window_bounds = array<i64: 8, 128>}, {transform_indices = @transform_2, window_bounds = array<i64: 8, 128>}]} {
    %c0_i32 = arith.constant 0 : i32
    %0 = arith.cmpi eq, %arg1, %c0_i32 : i32
    %1 = arith.extui %0 : i1 to i32
    %c0_i32_0 = arith.constant 0 : i32
    %2 = arith.cmpi ne, %1, %c0_i32_0 : i32
    scf.if %2 {
      %cst_11 = arith.constant 0.000000e+00 : f32
      %33 = vector.broadcast %cst_11 : f32 to vector<8x128xf32>
      %c0_12 = arith.constant 0 : index
      %c0_13 = arith.constant 0 : index
      %34 = vector.load %arg4[%c0_12, %c0_13] : memref<8x128xf32, #tpu.memory_space<vmem>>, vector<8x128xf32>
      tpu.vector_store %arg4[%c0_12, %c0_13], %33 {strides = array<i32>} : memref<8x128xf32, #tpu.memory_space<vmem>>, vector<8x128xf32>,
    } else {
    }
    %c0 = arith.constant 0 : index
    %c0_1 = arith.constant 0 : index
    %3 = vector.load %arg2[%c0, %c0_1] : memref<8x128xf32, #tpu.memory_space<vmem>>, vector<8x128xf32>
    %c0_2 = arith.constant 0 : index
    %c0_3 = arith.constant 0 : index
    %4 = vector.load %arg3[%c0_2, %c0_3] : memref<8x128xf32, #tpu.memory_space<vmem>>, vector<8x128xf32>
    %cst = arith.constant 0.000000e+00 : f32
    %5 = vector.broadcast %cst : f32 to vector<8x128xf32>
    %6 = arith.maximumf %3, %5 : vector<8x128xf32>
    %7 = math.absf %3 : vector<8x128xf32>
    %cst_4 = arith.constant 0.000000e+00 : f32
    %8 = vector.broadcast %cst_4 : f32 to vector<8x128xf32>
    %9 = arith.subf %8, %7 : vector<8x128xf32>
    %10 = math.exp %9 : vector<8x128xf32>
    %11 = math.log1p %10 : vector<8x128xf32>
    %12 = arith.addf %6, %11 : vector<8x128xf32>
    %cst_5 = arith.constant 2.000000e+00 : f32
    %13 = vector.broadcast %cst_5 : f32 to vector<8x128xf32>
    %14 = arith.mulf %13, %4 : vector<8x128xf32>
    %15 = arith.subf %3, %12 : vector<8x128xf32>
    %16 = arith.mulf %14, %15 : vector<8x128xf32>
    %cst_6 = arith.constant 1.000000e+00 : f32
    %17 = vector.broadcast %cst_6 : f32 to vector<8x128xf32>
    %18 = arith.subf %17, %4 : vector<8x128xf32>
    %cst_7 = arith.constant 5.000000e-01 : f32
    %19 = vector.broadcast %cst_7 : f32 to vector<8x128xf32>
    %20 = arith.mulf %19, %18 : vector<8x128xf32>
    %21 = arith.mulf %20, %12 : vector<8x128xf32>
    %22 = arith.subf %16, %21 : vector<8x128xf32>
    %c1_i32 = arith.constant 1 : i32
    %23 = arith.muli %arg0, %c1_i32 : i32
    %24 = arith.addi %23, %arg1 : i32
    %c1024_i32 = arith.constant 1024 : i32
    %25 = arith.muli %24, %c1024_i32 : i32
    %c1024_i32_8 = arith.constant 1024 : i32
    %26 = arith.addi %25, %c1024_i32_8 : i32
    %c2048_i32 = arith.constant 2048 : i32
    %27 = arith.cmpi sgt, %26, %c2048_i32 : i32
    %true = arith.constant true
    %28 = arith.xori %27, %true : i1
    %29 = arith.extui %28 : i1 to i32
    %c0_i32_9 = arith.constant 0 : i32
    %30 = arith.cmpi ne, %29, %c0_i32_9 : i32
    scf.if %30 {
      %c0_11 = arith.constant 0 : index
      %c0_12 = arith.constant 0 : index
      %33 = vector.load %arg4[%c0_11, %c0_12] : memref<8x128xf32, #tpu.memory_space<vmem>>, vector<8x128xf32>
      %34 = vector.shape_cast %22 : vector<8x128xf32> to vector<1x8x128xf32>
      %cst_13 = arith.constant dense<0.000000e+00> : vector<8x128xf32>
      %35 = vector.multi_reduction <add>, %34, %cst_13 [0] : vector<1x8x128xf32> to vector<8x128xf32>
      %36 = arith.addf %33, %35 : vector<8x128xf32>
      %c0_14 = arith.constant 0 : index
      %c0_15 = arith.constant 0 : index
      %37 = vector.load %arg4[%c0_14, %c0_15] : memref<8x128xf32, #tpu.memory_space<vmem>>, vector<8x128xf32>
      tpu.vector_store %arg4[%c0_14, %c0_15], %36 {strides = array<i32>} : memref<8x128xf32, #tpu.memory_space<vmem>>, vector<8x128xf32>,
    } else {
    }
    %31 = arith.extui %27 : i1 to i32
    %c0_i32_10 = arith.constant 0 : i32
    %32 = arith.cmpi ne, %31, %c0_i32_10 : i32
    scf.if %32 {
      %33 = tpu.iota {dimensions = array<i32: 0>} : vector<8x128xi32>
      %34 = tpu.iota {dimensions = array<i32: 1>} : vector<8x128xi32>
      %c128_i32 = arith.constant 128 : i32
      %35 = vector.broadcast %c128_i32 : i32 to vector<8x128xi32>
      %36 = arith.muli %33, %35 : vector<8x128xi32>
      %37 = vector.broadcast %25 : i32 to vector<8x128xi32>
      %38 = arith.addi %37, %36 : vector<8x128xi32>
      %39 = arith.addi %38, %34 : vector<8x128xi32>
      %c0_11 = arith.constant 0 : index
      %c0_12 = arith.constant 0 : index
      %40 = vector.load %arg4[%c0_11, %c0_12] : memref<8x128xf32, #tpu.memory_space<vmem>>, vector<8x128xf32>
      %c2048_i32_13 = arith.constant 2048 : i32
      %41 = vector.broadcast %c2048_i32_13 : i32 to vector<8x128xi32>
      %42 = arith.cmpi slt, %39, %41 : vector<8x128xi32>
      %cst_14 = arith.constant 0.000000e+00 : f32
      %43 = vector.broadcast %cst_14 : f32 to vector<8x128xf32>
      %44 = arith.select %42, %22, %43 : vector<8x128xi1>, vector<8x128xf32>
      %45 = vector.shape_cast %44 : vector<8x128xf32> to vector<1x8x128xf32>
      %cst_15 = arith.constant dense<0.000000e+00> : vector<8x128xf32>
      %46 = vector.multi_reduction <add>, %45, %cst_15 [0] : vector<1x8x128xf32> to vector<8x128xf32>
      %47 = arith.addf %40, %46 : vector<8x128xf32>
      %c0_16 = arith.constant 0 : index
      %c0_17 = arith.constant 0 : index
      %48 = vector.load %arg4[%c0_16, %c0_17] : memref<8x128xf32, #tpu.memory_space<vmem>>, vector<8x128xf32>
      tpu.vector_store %arg4[%c0_16, %c0_17], %47 {strides = array<i32>} : memref<8x128xf32, #tpu.memory_space<vmem>>, vector<8x128xf32>,
    } else {
    }
    return
  }
  func.func @transform_0(%arg0: i32, %arg1: i32) -> (i32, i32) {
    %c1_i32 = arith.constant 1 : i32
    %0 = arith.muli %arg0, %c1_i32 : i32
    %1 = arith.addi %0, %arg1 : i32
    %c1_i32_0 = arith.constant 1 : i32
    %2 = arith.minsi %1, %c1_i32_0 : i32
    %c0_i32 = arith.constant 0 : i32
    %c0_i32_1 = arith.constant 0 : i32
    return %2, %c0_i32 : i32, i32
  }
  func.func @transform_1(%arg0: i32, %arg1: i32) -> (i32, i32) {
    %c1_i32 = arith.constant 1 : i32
    %0 = arith.muli %arg0, %c1_i32 : i32
    %1 = arith.addi %0, %arg1 : i32
    %c1_i32_0 = arith.constant 1 : i32
    %2 = arith.minsi %1, %c1_i32_0 : i32
    %c0_i32 = arith.constant 0 : i32
    %c0_i32_1 = arith.constant 0 : i32
    return %2, %c0_i32 : i32, i32
  }
  func.func @transform_2(%arg0: i32, %arg1: i32) -> (i32, i32) {
    %c0_i32 = arith.constant 0 : i32
    %c0_i32_0 = arith.constant 0 : i32
    return %arg0, %c0_i32 : i32, i32
  }
}

</mosaic_0001>

<llo_original>
// kernel: tpu_custom_call.1
$region0: #{tpu_custom_call.1}
  #allocation0 [shape = 'u32[]', space=smem, size = 0x4, offset = 0x4, fixed_abs, tag = 'smem constant byte address 0x4 - core index']
  #allocation1 [shape = 'u32[144,128]{1,0:T(1,128)}', space=vmem, size = 0x12000, scoped, tag = 'internal scratch']
  %s0 = inlined_call_operand.hbm [shape: f32[16,128], index: 0, kind: input, shape index: {}]
  %s1 = inlined_call_operand.hbm [shape: f32[16,128], index: 1, kind: input, shape index: {}]
  %s2 = inlined_call_operand.hbm [shape: f32[16,128], index: 2, kind: output, shape index: {}]
  %s3 = sld [smem:[#allocation0]]
  $region61: #{tpu_custom_call.1} parent=0
    _
  %s5 = ssub.s32 1, %s3
  %s6 = scalar_select 0, %s5, %s3
  $region1: #{tpu_custom_call.1} parent=0
    #allocation2 [shape = 'u8[8192]{0}', space=vmem, size = 0x2000, scoped, tag = 'input window, operand 0']
    #allocation3 [shape = 's32[2]{0}', space=sflag, size = 0x8, scoped, tag = 'scoped memory for tpu_custom_call.1']
    #allocation4 [shape = 's32[2]{0}', space=sflag, size = 0x8, scoped, tag = 'scoped memory for tpu_custom_call.1']
    #allocation5 [shape = 'u8[8192]{0}', space=vmem, size = 0x2000, scoped, tag = 'input window, operand 1']
    #allocation6 [shape = 's32[2]{0}', space=sflag, size = 0x8, scoped, tag = 'scoped memory for tpu_custom_call.1']
    #allocation7 [shape = 'u8[8192]{0}', space=vmem, size = 0x2000, scoped, tag = 'output window, operand 0']
    %7 = vsyncpa [#allocation3], 0
    %s8 = scalar_lea.sflag [#allocation3], 1
    %9 = vsyncpa %s8, 0
    %10 = vsyncpa [#allocation6], 0
    %s11 = scalar_lea.sflag [#allocation6], 1
    %12 = vsyncpa %s11, 0
    %13 = vsyncpa [#allocation4], 0
    %s14 = scalar_lea.sflag [#allocation4], 1
    %15 = vsyncpa %s14, 0
    loop: start=0, step=1, limit=4
    $region2: #{tpu_custom_call.1} parent=1 // loop_pre_header
      _
    $region3: #{tpu_custom_call.1} parent=1 // loop_header
      %s17 = sphi 0, %s21
      %p18 = scmp.ge.s32.totalorder %s17, 4
      %s24 = sphi 0, %s36
      %s25 = sphi 0, %s32
      %s26 = sphi 0, %s24
      %s27 = sphi 0, %s25
      %s28 = sphi 0, %s26
      %s29 = sphi 0, %s27
      %s45 = sphi 0, %s47
      %s48 = sphi 0, %s45
      %s49 = sphi 0, %s48
      %s65 = sphi 0, %s49
      %s77 = sphi 0, %s79
      %s80 = sphi 0, %s77
      %s81 = sphi 0, %s80
      %s97 = sphi 0, %s81
      %s103 = sphi 0, %s105
      %s106 = sphi 0, %s103
      %s107 = sphi 0, %s106
      %s123 = sphi 0, %s107
    $region4: #{tpu_custom_call.1} parent=1 // loop_header_branch
      %20 = sbr.rel (%p18) target = $region8
    $region5: #{tpu_custom_call.1} parent=1 // loop_body
      %s22 = ssub.s32 %s17, 1
      %s23 = ssub.s32 %s17, 2
      %s30 = sadd.s32 1, %s25
      %p31 = scmp.ge.s32.totalorder %s30, 1
      %s32 = scalar_select %p31, 0, %s30
      %s33 = sadd.s32 1, %s24
      %s34 = scalar_select %p31, %s33, %s24
      %p35 = scmp.ge.s32.totalorder %s34, 2
      %s36 = scalar_select %p35, 0, %s34
      %s37 = sadd.s32 %s24, %s25
      %p38 = scmp.lt.s32.totalorder %s37, 1
      %s39 = scalar_select %p38, %s37, 1
      %s40 = sadd.s32 %s36, %s32
      %p41 = scmp.lt.s32.totalorder %s40, 1
      %s42 = scalar_select %p41, %s40, 1
      %s43 = ssub.s32 %s39, %s42
      %p44 = scmp.eq.s32.totalorder %s43, 0
      %s46 = sadd.s32 %s45, 1
      %s47 = scalar_select %p44, %s45, %s46
      %p50 = pneg %p44
      %p51 = scmp.eq.s32.totalorder %s17, 1
      %p52 = por %p50, %p51
      %p53 = scmp.ne.s32.totalorder %s45, %s48
      %p54 = scmp.eq.s32.totalorder %s17, 0
      %p55 = por %p53, %p54
      %p56 = scmp.ne.s32.totalorder %s45, %s48
      %p57 = scmp.eq.s32.totalorder %s22, 1
      %p58 = por %p56, %p57
      %p59 = scmp.ne.s32.totalorder %s48, %s49
      %p60 = scmp.eq.s32.totalorder %s22, 0
      %p61 = por %p59, %p60
      %p62 = scmp.ne.s32.totalorder %s48, %s49
      %p63 = scmp.eq.s32.totalorder %s23, 1
      %p64 = por %p62, %p63
      %p66 = scmp.ne.s32.totalorder %s49, %s65
      %p67 = scmp.eq.s32.totalorder %s23, 0
      %p68 = por %p66, %p67
      %s69 = sadd.s32 %s24, %s25
      %p70 = scmp.lt.s32.totalorder %s69, 1
      %s71 = scalar_select %p70, %s69, 1
      %s72 = sadd.s32 %s36, %s32
      %p73 = scmp.lt.s32.totalorder %s72, 1
      %s74 = scalar_select %p73, %s72, 1
      %s75 = ssub.s32 %s71, %s74
      %p76 = scmp.eq.s32.totalorder %s75, 0
      %s78 = sadd.s32 %s77, 1
      %s79 = scalar_select %p76, %s77, %s78
      %p82 = pneg %p76
      %p83 = scmp.eq.s32.totalorder %s17, 1
      %p84 = por %p82, %p83
      %p85 = scmp.ne.s32.totalorder %s77, %s80
      %p86 = scmp.eq.s32.totalorder %s17, 0
      %p87 = por %p85, %p86
      %p88 = scmp.ne.s32.totalorder %s77, %s80
      %p89 = scmp.eq.s32.totalorder %s22, 1
      %p90 = por %p88, %p89
      %p91 = scmp.ne.s32.totalorder %s80, %s81
      %p92 = scmp.eq.s32.totalorder %s22, 0
      %p93 = por %p91, %p92
      %p94 = scmp.ne.s32.totalorder %s80, %s81
      %p95 = scmp.eq.s32.totalorder %s23, 1
      %p96 = por %p94, %p95
      %p98 = scmp.ne.s32.totalorder %s81, %s97
      %p99 = scmp.eq.s32.totalorder %s23, 0
      %p100 = por %p98, %p99
      %s101 = ssub.s32 %s24, %s36
      %p102 = scmp.eq.s32.totalorder %s101, 0
      %s104 = sadd.s32 %s103, 1
      %s105 = scalar_select %p102, %s103, %s104
      %p108 = pneg %p102
      %p109 = scmp.eq.s32.totalorder %s17, 1
      %p110 = por %p108, %p109
      %p111 = scmp.ne.s32.totalorder %s103, %s106
      %p112 = scmp.eq.s32.totalorder %s17, 0
      %p113 = por %p111, %p112
      %p114 = scmp.ne.s32.totalorder %s103, %s106
      %p115 = scmp.eq.s32.totalorder %s22, 1
      %p116 = por %p114, %p115
      %p117 = scmp.ne.s32.totalorder %s106, %s107
      %p118 = scmp.eq.s32.totalorder %s22, 0
      %p119 = por %p117, %p118
      %p120 = scmp.ne.s32.totalorder %s106, %s107
      %p121 = scmp.eq.s32.totalorder %s23, 1
      %p122 = por %p120, %p121
      %p124 = scmp.ne.s32.totalorder %s107, %s123
      %p125 = scmp.eq.s32.totalorder %s23, 0
      %p126 = por %p124, %p125
      %p127 = scmp.le.s32.totalorder 1, %s17
      %p128 = scmp.lt.s32.totalorder %s17, 3
      %p129 = pnand %p127, %p128
      %p130 = pneg %p129
      // Predicated region
      $region9: #{tpu_custom_call.1} parent=5 // pred_check
        _
      $region10: #{tpu_custom_call.1} parent=5 // pred_check_branch
        %132 = sbr.rel (%p129) target = $region12
      $region11: #{tpu_custom_call.1} parent=5 // pred_region
        %s133 = ssub.s32 %s17, 1
      $region12: #{tpu_custom_call.1} parent=5 // pred_fallthru
        _
      %p134 = scmp.lt.s32.totalorder %s17, 2
      // Predicated region
      $region13: #{tpu_custom_call.1} parent=5 // pred_check
        %p135 = pneg %p134
      $region14: #{tpu_custom_call.1} parent=5 // pred_check_branch
        %137 = sbr.rel (%p135) target = $region16
      $region15: #{tpu_custom_call.1} parent=5 // pred_region
        // Predicated region
        $region17: #{tpu_custom_call.1} parent=15 // pred_check
          %p138 = pneg %p55
        $region18: #{tpu_custom_call.1} parent=15 // pred_check_branch
          %140 = sbr.rel (%p138) target = $region20
        $region19: #{tpu_custom_call.1} parent=15 // pred_region
          %s141 = sand.u32 %s45, 1
          %s142 = scalar_lea.sflag [#allocation3], %s141
          %s143 = sand.u32 %s45, 1
          %s144 = smul.addr %s143, 8
          %s145 = scalar_lea.vmem [#allocation2], %s144
          %s146 = sadd.s32 %s24, %s25
          %p147 = scmp.lt.s32.totalorder %s146, 1
          %s148 = scalar_select %p147, %s146, 1
          %s150 = ssub.s32 128, 128
          %151 = vsyncadd %s142, %s150
          %s152 = smul.addr %s148, 128
          %s153 = scalar_lea.hbm %s0, %s152
          %s155 = sshll.u32 %s145, 4
          %s156 = int_to_ptr.vmem [resolvable:$true] %s155
          %158 = dma.hbm_to_vmem [thread:$0]  %s153, 128, %s156, %s142
        $region20: #{tpu_custom_call.1} parent=15 // pred_fallthru
          _
        // Predicated region
        $region21: #{tpu_custom_call.1} parent=15 // pred_check
          %p159 = pneg %p87
        $region22: #{tpu_custom_call.1} parent=15 // pred_check_branch
          %161 = sbr.rel (%p159) target = $region24
        $region23: #{tpu_custom_call.1} parent=15 // pred_region
          %s162 = sand.u32 %s77, 1
          %s163 = scalar_lea.sflag [#allocation6], %s162
          %s164 = sand.u32 %s77, 1
          %s165 = smul.addr %s164, 8
          %s166 = scalar_lea.vmem [#allocation5], %s165
          %s167 = sadd.s32 %s24, %s25
          %p168 = scmp.lt.s32.totalorder %s167, 1
          %s169 = scalar_select %p168, %s167, 1
          %s171 = ssub.s32 128, 128
          %172 = vsyncadd %s163, %s171
          %s173 = smul.addr %s169, 128
          %s174 = scalar_lea.hbm %s1, %s173
          %s176 = sshll.u32 %s166, 4
          %s177 = int_to_ptr.vmem [resolvable:$true] %s176
          %179 = dma.hbm_to_vmem [thread:$0]  %s174, 128, %s177, %s163
        $region24: #{tpu_custom_call.1} parent=15 // pred_fallthru
          _
      $region16: #{tpu_custom_call.1} parent=5 // pred_fallthru
        _
      %p180 = scmp.le.s32.totalorder 1, %s17
      %p181 = scmp.lt.s32.totalorder %s17, 3
      %p182 = pnand %p180, %p181
      %p183 = pneg %p182
      // Predicated region
      $region25: #{tpu_custom_call.1} parent=5 // pred_check
        _
      $region26: #{tpu_custom_call.1} parent=5 // pred_check_branch
        %185 = sbr.rel (%p182) target = $region28
      $region27: #{tpu_custom_call.1} parent=5 // pred_region
        %s186 = ssub.s32 %s17, 1
        %s187 = sand.u32 %s48, 1
        %s188 = scalar_lea.sflag [#allocation3], %s187
        %s189 = sand.u32 %s48, 1
        %s190 = smul.addr %s189, 8
        %s191 = scalar_lea.vmem [#allocation2], %s190
        // Predicated region
        $region29: #{tpu_custom_call.1} parent=27 // pred_check
          %p192 = pneg %p61
        $region30: #{tpu_custom_call.1} parent=27 // pred_check_branch
          %194 = sbr.rel (%p192) target = $region32
        $region31: #{tpu_custom_call.1} parent=27 // pred_region
          %195 = dma.done %s188, 128
        $region32: #{tpu_custom_call.1} parent=27 // pred_fallthru
          _
        %s196 = sand.u32 %s80, 1
        %s197 = scalar_lea.sflag [#allocation6], %s196
        %s198 = sand.u32 %s80, 1
        %s199 = smul.addr %s198, 8
        %s200 = scalar_lea.vmem [#allocation5], %s199
        // Predicated region
        $region33: #{tpu_custom_call.1} parent=27 // pred_check
          %p201 = pneg %p93
        $region34: #{tpu_custom_call.1} parent=27 // pred_check_branch
          %203 = sbr.rel (%p201) target = $region36
        $region35: #{tpu_custom_call.1} parent=27 // pred_region
          %204 = dma.done %s197, 128
        $region36: #{tpu_custom_call.1} parent=27 // pred_fallthru
          _
        %s205 = sand.u32 %s48, 1
        %s206 = scalar_lea.sflag [#allocation3], %s205
        %s207 = sand.u32 %s48, 1
        %s208 = smul.addr %s207, 8
        %s209 = scalar_lea.vmem [#allocation2], %s208
        %p210 = pneg %p61
        %p211 = pneg %p58
        %s212 = sand.u32 %s80, 1
        %s213 = scalar_lea.sflag [#allocation6], %s212
        %s214 = sand.u32 %s80, 1
        %s215 = smul.addr %s214, 8
        %s216 = scalar_lea.vmem [#allocation5], %s215
        %p217 = pneg %p93
        %p218 = pneg %p90
        %p219 = pneg %p119
        %p220 = pneg %p116
        %s221 = sand.u32 %s106, 1
        %s222 = scalar_lea.sflag [#allocation4], %s221
        %s223 = sand.u32 %s106, 1
        %s224 = smul.addr %s223, 8
        %s225 = scalar_lea.vmem [#allocation7], %s224
        %s226 = sadd.s32 %s26, %s27
        %p227 = scmp.lt.s32.totalorder %s226, 1
        %s228 = scalar_select %p227, %s226, 1
        %s229 = sadd.s32 %s26, %s27
        %p230 = scmp.lt.s32.totalorder %s229, 1
        %s231 = scalar_select %p230, %s229, 1
        %p232 = scmp.eq.s32.totalorder %s27, 0
        // Predicated region
        $region37: #{tpu_custom_call.1} parent=27 // pred_check
          %p233 = pneg %p232
        $region38: #{tpu_custom_call.1} parent=27 // pred_check_branch
          %235 = sbr.rel (%p233) target = $region40
        $region39: #{tpu_custom_call.1} parent=27 // pred_region
          %236 = vst [vmem:[%s225] sm:$0xff] 0.0
        $region40: #{tpu_custom_call.1} parent=27 // pred_fallthru
          _
        %v237 = vld [vmem:[%s191] sm:$0xff]
        %v238 = vld [vmem:[%s200] sm:$0xff]
        %v239 = vmax.f32 %v237, 0.0
        %v240 = vand.u32 2147483647, %v237
        %v241 = vsub.f32 0.0, %v240
        %v242 = vmul.f32 %v241, 1.442695
        %v243 = vpow.pop %v242
        %v244 = vadd.f32 %v243, 1.0
        %v245 = vlog2.pop %v244
        %v246 = vmul.f32 %v245, 0.6931472
        %v247 = vmul.f32 -0.5, %v243
        %v248 = vadd.f32 %v247, 1.0
        %v249 = vmul.f32 %v248, %v243
        %v250 = vand.u32 2147483647, %v243
        %vm251 = vcmp.lt.f32.partialorder %v250, 0.0004427343
        %v252 = vsel %vm251, %v249, %v246
        %v253 = vadd.f32 %v239, %v252
        %v254 = vmul.f32 %v238, 2.0
        %v255 = vsub.f32 %v237, %v253
        %v256 = vmul.f32 %v254, %v255
        %v257 = vsub.f32 1.0, %v238
        %v258 = vmul.f32 %v257, 0.5
        %v259 = vmul.f32 %v258, %v253
        %v260 = vsub.f32 %v256, %v259
        %s261 = sadd.s32 %s26, %s27
        %s262 = smul.u32 %s261, 1024
        %s263 = sadd.s32 %s262, 1024
        %p264 = scmp.gt.s32.totalorder %s263, 2048
        %p265 = scmp.le.s32.totalorder %s263, 2048
        // Predicated region
        $region41: #{tpu_custom_call.1} parent=27 // pred_check
          %p266 = pneg %p265
        $region42: #{tpu_custom_call.1} parent=27 // pred_check_branch
          %268 = sbr.rel (%p266) target = $region44
        $region43: #{tpu_custom_call.1} parent=27 // pred_region
          %v269 = vld [vmem:[%s225] sm:$0xff]
          %v270 = vadd.f32 %v260, 0.0
          %v271 = vadd.f32 %v269, %v270
          %272 = vst [vmem:[%s225] sm:$0xff] %v271
        $region44: #{tpu_custom_call.1} parent=27 // pred_fallthru
          _
        // Predicated region
        $region45: #{tpu_custom_call.1} parent=27 // pred_check
          %p273 = pneg %p264
        $region46: #{tpu_custom_call.1} parent=27 // pred_check_branch
          %275 = sbr.rel (%p273) target = $region48
        $region47: #{tpu_custom_call.1} parent=27 // pred_region
          %v276 = vlaneseq
          %v277 = vshrl.u32 %v276, 7
          %v278 = vlaneseq
          %v279 = vand.u32 %v278, 127
          %v280 = vmul.u32 %v277, 128
          %v281 = vstv %s262
          %v282 = vadd.s32 %v281, %v280
          %v283 = vadd.s32 %v282, %v279
          %v284 = vld [vmem:[%s225] sm:$0xff]
          %vm285 = vcmp.lt.s32.totalorder %v283, 2048
          %v286 = vsel %vm285, %v260, 0.0
          %v287 = vadd.f32 %v286, 0.0
          %v288 = vadd.f32 %v284, %v287
          %289 = vst [vmem:[%s225] sm:$0xff] %v288
        $region48: #{tpu_custom_call.1} parent=27 // pred_fallthru
          _
        %s290 = sand.u32 %s106, 1
        %s291 = scalar_lea.sflag [#allocation4], %s290
        %s292 = sand.u32 %s106, 1
        %s293 = smul.addr %s292, 8
        %s294 = scalar_lea.vmem [#allocation7], %s293
        // Predicated region
        $region49: #{tpu_custom_call.1} parent=27 // pred_check
          %p295 = pneg %p116
        $region50: #{tpu_custom_call.1} parent=27 // pred_check_branch
          %297 = sbr.rel (%p295) target = $region52
        $region51: #{tpu_custom_call.1} parent=27 // pred_region
          %s299 = ssub.s32 128, 128
          %300 = vsyncadd %s291, %s299
          %s301 = smul.addr %s26, 128
          %s302 = scalar_lea.hbm %s2, %s301
          %s304 = sshll.u32 %s294, 4
          %s305 = int_to_ptr.vmem [resolvable:$true] %s304
          %307 = dma.vmem_to_hbm [thread:$0]  %s305, 128, %s302, %s291
        $region52: #{tpu_custom_call.1} parent=27 // pred_fallthru
          _
      $region28: #{tpu_custom_call.1} parent=5 // pred_fallthru
        _
      %p308 = scmp.le.s32.totalorder 2, %s17
      // Predicated region
      $region53: #{tpu_custom_call.1} parent=5 // pred_check
        %p309 = pneg %p308
      $region54: #{tpu_custom_call.1} parent=5 // pred_check_branch
        %311 = sbr.rel (%p309) target = $region56
      $region55: #{tpu_custom_call.1} parent=5 // pred_region
        %s312 = ssub.s32 %s17, 2
        // Predicated region
        $region57: #{tpu_custom_call.1} parent=55 // pred_check
          %p313 = pneg %p122
        $region58: #{tpu_custom_call.1} parent=55 // pred_check_branch
          %315 = sbr.rel (%p313) target = $region60
        $region59: #{tpu_custom_call.1} parent=55 // pred_region
          %s316 = sand.u32 %s107, 1
          %s317 = scalar_lea.sflag [#allocation4], %s316
          %s318 = sand.u32 %s107, 1
          %s319 = smul.addr %s318, 8
          %s320 = scalar_lea.vmem [#allocation7], %s319
          %321 = dma.done %s317, 128
        $region60: #{tpu_custom_call.1} parent=55 // pred_fallthru
          _
      $region56: #{tpu_custom_call.1} parent=5 // pred_fallthru
        _
    $region6: #{tpu_custom_call.1} parent=1 // loop_footer
      %s21 = sadd.s32 1, %s17
    $region7: #{tpu_custom_call.1} parent=1 // loop_footer_branch
      %16 = sbr.rel target = $region3
    $region8: #{tpu_custom_call.1} parent=1 // loop_exit
      _
    %322 = vsyncpa [#allocation3], 1
    %s323 = scalar_lea.sflag [#allocation3], 1
    %324 = vsyncpa %s323, 1
    %325 = vsyncpa [#allocation6], 1
    %s326 = scalar_lea.sflag [#allocation6], 1
    %327 = vsyncpa %s326, 1
    %328 = vsyncpa [#allocation4], 1
    %s329 = scalar_lea.sflag [#allocation4], 1
    %330 = vsyncpa %s329, 1

</llo_original>
